<compile_context>
chip_gen: v5e
topology: v5e:2x2
jax: 0.10.0
libtpu: 0.0.40
codegen_flags: <defaults>
</compile_context>

<pallas_src>
import functools

import jax
import jax.numpy as jnp
from jax import lax
from jax.experimental import pallas as pl
from jax.experimental.pallas import tpu as pltpu

POOL_K = 5  # self.kernel_size is hard-coded to 5 in the module


def _round_up(x, m):
    return (x + m - 1) // m * m


def _usc_kernel(w_ref, x_ref, s_ref, *, K, Ho, Wo):
    """One batch element per grid step.

    w_ref : SMEM (C,)            effective weights  (-softplus(w))
    x_ref : VMEM (1, C, Hp, Wp)  color padded with -inf (pool halo + alignment)
    s_ref : VMEM (1, 1, Ho, Wo)  lane-dense output block (valid data top-left)
    """
    C = x_ref.shape[1]
    pos_inf = jnp.float32(jnp.inf)
    neg_inf = jnp.float32(-jnp.inf)
    acc = jnp.zeros((Ho, Wo), jnp.float32)
    # C (= n_colors) is tiny, so a static unroll is fine.  For large C switch
    # to lax.fori_loop(..., unroll=True) to keep vreg pressure bounded.
    for c in range(C):
        xmax = x_ref[0, c]                                   # (Hp, Wp)
        # Min-pool operand derived from the same plane: flip the -inf padding
        # to +inf (real image data is assumed finite).
        xmin = jnp.where(xmax == neg_inf, pos_inf, xmax)

        # --- separable 5x5 pooling: lane (W) pass, then sublane (H) pass ---
        rmax = xmax[:, 0:Wo]
        rmin = xmin[:, 0:Wo]
        for dw in range(1, K):
            rmax = jnp.maximum(rmax, xmax[:, dw:dw + Wo])
            rmin = jnp.minimum(rmin, xmin[:, dw:dw + Wo])
        mx = rmax[0:Ho, :]
        mn = rmin[0:Ho, :]
        for dh in range(1, K):
            mx = jnp.maximum(mx, rmax[dh:dh + Ho, :])
            mn = jnp.minimum(mn, rmin[dh:dh + Ho, :])

        # delta = maxpool(x) + maxpool(-x) = local max - local min
        acc = acc + (mx - mn) * w_ref[c]                     # 'chw,c->hw'
    s_ref[...] = jnp.exp(acc)[None, None]


def usc_init_forward(color, w_param, *, kernel_size_arg=5):
    """Forward pass of uSC_init.  color: (B, C, H, W) float32, NCHW."""
    B, C, H, W = color.shape
    pad = kernel_size_arg // 2          # self.padding (constructor arg)
    K = POOL_K                          # self.kernel_size (hard-coded 5)
    Ho = H + 2 * pad - K + 1
    Wo = W + 2 * pad - K + 1

    # Aligned output block (lane-dense stores); the padded input carries both
    # the pooling halo and the alignment padding, all filled with -inf so the
    # pooling result is unaffected.
    Ho_a = _round_up(Ho, 8)
    Wo_a = _round_up(Wo, 128)
    Hp_a = Ho_a + K - 1
    Wp_a = Wo_a + K - 1

    # prepare_weights: w = -softplus(self.w)   (tiny per-channel scalars)
    w_eff = -jnp.logaddexp(w_param.astype(jnp.float32), 0.0)

    # Single -inf-padded copy (the +inf padding for the min pool is derived
    # inside the kernel).
    x_pad = jnp.pad(color.astype(jnp.float32),
                    ((0, 0), (0, 0),
                     (pad, Hp_a - H - pad),
                     (pad, Wp_a - W - pad)),
                    constant_values=-jnp.inf)

    kernel = functools.partial(_usc_kernel, K=K, Ho=Ho_a, Wo=Wo_a)
    s_full = pl.pallas_call(
        kernel,
        out_shape=jax.ShapeDtypeStruct((B, 1, Ho_a, Wo_a), jnp.float32),
        grid=(B,),
        in_specs=[
            pl.BlockSpec(memory_space=pltpu.MemorySpace.SMEM),         # w_eff
            pl.BlockSpec((1, C, Hp_a, Wp_a), lambda b: (b, 0, 0, 0)),  # x_pad
        ],
        out_specs=pl.BlockSpec((1, 1, Ho_a, Wo_a), lambda b: (b, 0, 0, 0)),
        compiler_params=pltpu.CompilerParams(
            dimension_semantics=("parallel",)),
    )(w_eff, x_pad)

    s = s_full[:, :, :Ho, :Wo]
    cs = jnp.ones_like(s)   # constant output: produced by XLA, not the kernel
    return s, cs


def usc_init_forward_ref(color, w_param, *, kernel_size_arg=5):
    """Pure-JAX reference (mirrors the PyTorch forward)."""
    pad = kernel_size_arg // 2
    K = POOL_K
    w_eff = -jnp.logaddexp(w_param.astype(jnp.float32), 0.0)
    pads = [(0, 0), (0, 0), (pad, pad), (pad, pad)]
    mp_pos = lax.reduce_window(color, -jnp.inf, lax.max,
                               (1, 1, K, K), (1, 1, 1, 1), pads)
    mp_neg = lax.reduce_window(-color, -jnp.inf, lax.max,
                               (1, 1, K, K), (1, 1, 1, 1), pads)
    delta = mp_pos + mp_neg
    s = jnp.exp(jnp.einsum('bchw,c->bhw', delta, w_eff))[:, None]
    return s, jnp.ones_like(s)


if __name__ == "__main__":
    key = jax.random.PRNGKey(0)
    k_x, k_w = jax.random.split(key)

    B, C, H, W = 2, 4, 16, 16          # n_colors = 4
    color = jax.random.normal(k_x, (B, C, H, W), dtype=jnp.float32)
    # Deterministic parameter init (module init on a 1-D tensor is degenerate;
    # any deterministic values stand in for kaiming init of self.w).
    w_param = jax.random.uniform(k_w, (C,), dtype=jnp.float32,
                                 minval=-1.0, maxval=1.0)

    s, cs = usc_init_forward(color, w_param, kernel_size_arg=5)
    s = jax.block_until_ready(s)
    cs = jax.block_until_ready(cs)

    s_ref, cs_ref = usc_init_forward_ref(color, w_param, kernel_size_arg=5)
    assert s.shape == (B, 1, H, W) and cs.shape == (B, 1, H, W)
    assert jnp.allclose(s, s_ref, rtol=1e-5, atol=1e-5)
    assert jnp.allclose(cs, cs_ref)

    print("KERNEL_OK")
</pallas_src>

<mosaic_0001>
module attributes {stable_mosaic.version = 11 : i64} {
  func.func @_usc_kernel(%arg0: i32, %arg1: memref<4xf32, #tpu.memory_space<smem>>, %arg2: memref<1x4x20x132xf32, #tpu.memory_space<vmem>>, %arg3: memref<1x1x16x128xf32, #tpu.memory_space<vmem>>) attributes {dimension_semantics = [#tpu.dimension_semantics<parallel>], iteration_bounds = array<i64: 2>, scalar_prefetch = 0 : i64, scratch_operands = 0 : i64, tpu.core_type = #tpu.core_type<tc>, window_params = [{transform_indices = @transform_0, window_bounds = array<i64: 4>}, {transform_indices = @transform_1, window_bounds = array<i64: 1, 4, 20, 132>}, {transform_indices = @transform_2, window_bounds = array<i64: 1, 1, 16, 128>}]} {
    %cst = arith.constant 0.000000e+00 : f32
    %0 = vector.broadcast %cst : f32 to vector<16x128xf32>
    %c0 = arith.constant 0 : index
    %c0_0 = arith.constant 0 : index
    %c0_1 = arith.constant 0 : index
    %c0_2 = arith.constant 0 : index
    %1 = vector.load %arg2[%c0, %c0_0, %c0_1, %c0_2] : memref<1x4x20x132xf32, #tpu.memory_space<vmem>>, vector<1x1x20x132xf32>
    %2 = vector.shape_cast %1 : vector<1x1x20x132xf32> to vector<20x132xf32>
    %cst_3 = arith.constant 0xFF800000 : f32
    %3 = vector.broadcast %cst_3 : f32 to vector<20x132xf32>
    %4 = arith.cmpf oeq, %2, %3 : vector<20x132xf32>
    %cst_4 = arith.constant 0x7F800000 : f32
    %5 = vector.broadcast %cst_4 : f32 to vector<20x132xf32>
    %6 = arith.select %4, %5, %2 : vector<20x132xi1>, vector<20x132xf32>
    %7 = vector.extract_strided_slice %2 {offsets = [0, 0], sizes = [20, 128], strides = [1, 1]} : vector<20x132xf32> to vector<20x128xf32>
    %8 = vector.extract_strided_slice %6 {offsets = [0, 0], sizes = [20, 128], strides = [1, 1]} : vector<20x132xf32> to vector<20x128xf32>
    %9 = vector.extract_strided_slice %2 {offsets = [0, 1], sizes = [20, 128], strides = [1, 1]} : vector<20x132xf32> to vector<20x128xf32>
    %10 = arith.maximumf %7, %9 : vector<20x128xf32>
    %11 = vector.extract_strided_slice %6 {offsets = [0, 1], sizes = [20, 128], strides = [1, 1]} : vector<20x132xf32> to vector<20x128xf32>
    %12 = arith.minimumf %8, %11 : vector<20x128xf32>
    %13 = vector.extract_strided_slice %2 {offsets = [0, 2], sizes = [20, 128], strides = [1, 1]} : vector<20x132xf32> to vector<20x128xf32>
    %14 = arith.maximumf %10, %13 : vector<20x128xf32>
    %15 = vector.extract_strided_slice %6 {offsets = [0, 2], sizes = [20, 128], strides = [1, 1]} : vector<20x132xf32> to vector<20x128xf32>
    %16 = arith.minimumf %12, %15 : vector<20x128xf32>
    %17 = vector.extract_strided_slice %2 {offsets = [0, 3], sizes = [20, 128], strides = [1, 1]} : vector<20x132xf32> to vector<20x128xf32>
    %18 = arith.maximumf %14, %17 : vector<20x128xf32>
    %19 = vector.extract_strided_slice %6 {offsets = [0, 3], sizes = [20, 128], strides = [1, 1]} : vector<20x132xf32> to vector<20x128xf32>
    %20 = arith.minimumf %16, %19 : vector<20x128xf32>
    %21 = vector.extract_strided_slice %2 {offsets = [0, 4], sizes = [20, 128], strides = [1, 1]} : vector<20x132xf32> to vector<20x128xf32>
    %22 = arith.maximumf %18, %21 : vector<20x128xf32>
    %23 = vector.extract_strided_slice %6 {offsets = [0, 4], sizes = [20, 128], strides = [1, 1]} : vector<20x132xf32> to vector<20x128xf32>
    %24 = arith.minimumf %20, %23 : vector<20x128xf32>
    %25 = vector.extract_strided_slice %22 {offsets = [0, 0], sizes = [16, 128], strides = [1, 1]} : vector<20x128xf32> to vector<16x128xf32>
    %26 = vector.extract_strided_slice %24 {offsets = [0, 0], sizes = [16, 128], strides = [1, 1]} : vector<20x128xf32> to vector<16x128xf32>
    %27 = vector.extract_strided_slice %22 {offsets = [1, 0], sizes = [16, 128], strides = [1, 1]} : vector<20x128xf32> to vector<16x128xf32>
    %28 = arith.maximumf %25, %27 : vector<16x128xf32>
    %29 = vector.extract_strided_slice %24 {offsets = [1, 0], sizes = [16, 128], strides = [1, 1]} : vector<20x128xf32> to vector<16x128xf32>
    %30 = arith.minimumf %26, %29 : vector<16x128xf32>
    %31 = vector.extract_strided_slice %22 {offsets = [2, 0], sizes = [16, 128], strides = [1, 1]} : vector<20x128xf32> to vector<16x128xf32>
    %32 = arith.maximumf %28, %31 : vector<16x128xf32>
    %33 = vector.extract_strided_slice %24 {offsets = [2, 0], sizes = [16, 128], strides = [1, 1]} : vector<20x128xf32> to vector<16x128xf32>
    %34 = arith.minimumf %30, %33 : vector<16x128xf32>
    %35 = vector.extract_strided_slice %22 {offsets = [3, 0], sizes = [16, 128], strides = [1, 1]} : vector<20x128xf32> to vector<16x128xf32>
    %36 = arith.maximumf %32, %35 : vector<16x128xf32>
    %37 = vector.extract_strided_slice %24 {offsets = [3, 0], sizes = [16, 128], strides = [1, 1]} : vector<20x128xf32> to vector<16x128xf32>
    %38 = arith.minimumf %34, %37 : vector<16x128xf32>
    %39 = vector.extract_strided_slice %22 {offsets = [4, 0], sizes = [16, 128], strides = [1, 1]} : vector<20x128xf32> to vector<16x128xf32>
    %40 = arith.maximumf %36, %39 : vector<16x128xf32>
    %41 = vector.extract_strided_slice %24 {offsets = [4, 0], sizes = [16, 128], strides = [1, 1]} : vector<20x128xf32> to vector<16x128xf32>
    %42 = arith.minimumf %38, %41 : vector<16x128xf32>
    %43 = arith.subf %40, %42 : vector<16x128xf32>
    %c0_5 = arith.constant 0 : index
    %44 = memref.load %arg1[%c0_5] : memref<4xf32, #tpu.memory_space<smem>>
    %45 = vector.broadcast %44 : f32 to vector<16x128xf32>
    %46 = arith.mulf %43, %45 : vector<16x128xf32>
    %47 = arith.addf %0, %46 : vector<16x128xf32>
    %c0_6 = arith.constant 0 : index
    %c1 = arith.constant 1 : index
    %c0_7 = arith.constant 0 : index
    %c0_8 = arith.constant 0 : index
    %48 = vector.load %arg2[%c0_6, %c1, %c0_7, %c0_8] : memref<1x4x20x132xf32, #tpu.memory_space<vmem>>, vector<1x1x20x132xf32>
    %49 = vector.shape_cast %48 : vector<1x1x20x132xf32> to vector<20x132xf32>
    %cst_9 = arith.constant 0xFF800000 : f32
    %50 = vector.broadcast %cst_9 : f32 to vector<20x132xf32>
    %51 = arith.cmpf oeq, %49, %50 : vector<20x132xf32>
    %cst_10 = arith.constant 0x7F800000 : f32
    %52 = vector.broadcast %cst_10 : f32 to vector<20x132xf32>
    %53 = arith.select %51, %52, %49 : vector<20x132xi1>, vector<20x132xf32>
    %54 = vector.extract_strided_slice %49 {offsets = [0, 0], sizes = [20, 128], strides = [1, 1]} : vector<20x132xf32> to vector<20x128xf32>
    %55 = vector.extract_strided_slice %53 {offsets = [0, 0], sizes = [20, 128], strides = [1, 1]} : vector<20x132xf32> to vector<20x128xf32>
    %56 = vector.extract_strided_slice %49 {offsets = [0, 1], sizes = [20, 128], strides = [1, 1]} : vector<20x132xf32> to vector<20x128xf32>
    %57 = arith.maximumf %54, %56 : vector<20x128xf32>
    %58 = vector.extract_strided_slice %53 {offsets = [0, 1], sizes = [20, 128], strides = [1, 1]} : vector<20x132xf32> to vector<20x128xf32>
    %59 = arith.minimumf %55, %58 : vector<20x128xf32>
    %60 = vector.extract_strided_slice %49 {offsets = [0, 2], sizes = [20, 128], strides = [1, 1]} : vector<20x132xf32> to vector<20x128xf32>
    %61 = arith.maximumf %57, %60 : vector<20x128xf32>
    %62 = vector.extract_strided_slice %53 {offsets = [0, 2], sizes = [20, 128], strides = [1, 1]} : vector<20x132xf32> to vector<20x128xf32>
    %63 = arith.minimumf %59, %62 : vector<20x128xf32>
    %64 = vector.extract_strided_slice %49 {offsets = [0, 3], sizes = [20, 128], strides = [1, 1]} : vector<20x132xf32> to vector<20x128xf32>
    %65 = arith.maximumf %61, %64 : vector<20x128xf32>
    %66 = vector.extract_strided_slice %53 {offsets = [0, 3], sizes = [20, 128], strides = [1, 1]} : vector<20x132xf32> to vector<20x128xf32>
    %67 = arith.minimumf %63, %66 : vector<20x128xf32>
    %68 = vector.extract_strided_slice %49 {offsets = [0, 4], sizes = [20, 128], strides = [1, 1]} : vector<20x132xf32> to vector<20x128xf32>
    %69 = arith.maximumf %65, %68 : vector<20x128xf32>
    %70 = vector.extract_strided_slice %53 {offsets = [0, 4], sizes = [20, 128], strides = [1, 1]} : vector<20x132xf32> to vector<20x128xf32>
    %71 = arith.minimumf %67, %70 : vector<20x128xf32>
    %72 = vector.extract_strided_slice %69 {offsets = [0, 0], sizes = [16, 128], strides = [1, 1]} : vector<20x128xf32> to vector<16x128xf32>
    %73 = vector.extract_strided_slice %71 {offsets = [0, 0], sizes = [16, 128], strides = [1, 1]} : vector<20x128xf32> to vector<16x128xf32>
    %74 = vector.extract_strided_slice %69 {offsets = [1, 0], sizes = [16, 128], strides = [1, 1]} : vector<20x128xf32> to vector<16x128xf32>
    %75 = arith.maximumf %72, %74 : vector<16x128xf32>
    %76 = vector.extract_strided_slice %71 {offsets = [1, 0], sizes = [16, 128], strides = [1, 1]} : vector<20x128xf32> to vector<16x128xf32>
    %77 = arith.minimumf %73, %76 : vector<16x128xf32>
    %78 = vector.extract_strided_slice %69 {offsets = [2, 0], sizes = [16, 128], strides = [1, 1]} : vector<20x128xf32> to vector<16x128xf32>
    %79 = arith.maximumf %75, %78 : vector<16x128xf32>
    %80 = vector.extract_strided_slice %71 {offsets = [2, 0], sizes = [16, 128], strides = [1, 1]} : vector<20x128xf32> to vector<16x128xf32>
    %81 = arith.minimumf %77, %80 : vector<16x128xf32>
    %82 = vector.extract_strided_slice %69 {offsets = [3, 0], sizes = [16, 128], strides = [1, 1]} : vector<20x128xf32> to vector<16x128xf32>
    %83 = arith.maximumf %79, %82 : vector<16x128xf32>
    %84 = vector.extract_strided_slice %71 {offsets = [3, 0], sizes = [16, 128], strides = [1, 1]} : vector<20x128xf32> to vector<16x128xf32>
    %85 = arith.minimumf %81, %84 : vector<16x128xf32>
    %86 = vector.extract_strided_slice %69 {offsets = [4, 0], sizes = [16, 128], strides = [1, 1]} : vector<20x128xf32> to vector<16x128xf32>
    %87 = arith.maximumf %83, %86 : vector<16x128xf32>
    %88 = vector.extract_strided_slice %71 {offsets = [4, 0], sizes = [16, 128], strides = [1, 1]} : vector<20x128xf32> to vector<16x128xf32>
    %89 = arith.minimumf %85, %88 : vector<16x128xf32>
    %90 = arith.subf %87, %89 : vector<16x128xf32>
    %c1_11 = arith.constant 1 : index
    %91 = memref.load %arg1[%c1_11] : memref<4xf32, #tpu.memory_space<smem>>
    %92 = vector.broadcast %91 : f32 to vector<16x128xf32>
    %93 = arith.mulf %90, %92 : vector<16x128xf32>
    %94 = arith.addf %47, %93 : vector<16x128xf32>
    %c0_12 = arith.constant 0 : index
    %c2 = arith.constant 2 : index
    %c0_13 = arith.constant 0 : index
    %c0_14 = arith.constant 0 : index
    %95 = vector.load %arg2[%c0_12, %c2, %c0_13, %c0_14] : memref<1x4x20x132xf32, #tpu.memory_space<vmem>>, vector<1x1x20x132xf32>
    %96 = vector.shape_cast %95 : vector<1x1x20x132xf32> to vector<20x132xf32>
    %cst_15 = arith.constant 0xFF800000 : f32
    %97 = vector.broadcast %cst_15 : f32 to vector<20x132xf32>
    %98 = arith.cmpf oeq, %96, %97 : vector<20x132xf32>
    %cst_16 = arith.constant 0x7F800000 : f32
    %99 = vector.broadcast %cst_16 : f32 to vector<20x132xf32>
    %100 = arith.select %98, %99, %96 : vector<20x132xi1>, vector<20x132xf32>
    %101 = vector.extract_strided_slice %96 {offsets = [0, 0], sizes = [20, 128], strides = [1, 1]} : vector<20x132xf32> to vector<20x128xf32>
    %102 = vector.extract_strided_slice %100 {offsets = [0, 0], sizes = [20, 128], strides = [1, 1]} : vector<20x132xf32> to vector<20x128xf32>
    %103 = vector.extract_strided_slice %96 {offsets = [0, 1], sizes = [20, 128], strides = [1, 1]} : vector<20x132xf32> to vector<20x128xf32>
    %104 = arith.maximumf %101, %103 : vector<20x128xf32>
    %105 = vector.extract_strided_slice %100 {offsets = [0, 1], sizes = [20, 128], strides = [1, 1]} : vector<20x132xf32> to vector<20x128xf32>
    %106 = arith.minimumf %102, %105 : vector<20x128xf32>
    %107 = vector.extract_strided_slice %96 {offsets = [0, 2], sizes = [20, 128], strides = [1, 1]} : vector<20x132xf32> to vector<20x128xf32>
    %108 = arith.maximumf %104, %107 : vector<20x128xf32>
    %109 = vector.extract_strided_slice %100 {offsets = [0, 2], sizes = [20, 128], strides = [1, 1]} : vector<20x132xf32> to vector<20x128xf32>
    %110 = arith.minimumf %106, %109 : vector<20x128xf32>
    %111 = vector.extract_strided_slice %96 {offsets = [0, 3], sizes = [20, 128], strides = [1, 1]} : vector<20x132xf32> to vector<20x128xf32>
    %112 = arith.maximumf %108, %111 : vector<20x128xf32>
    %113 = vector.extract_strided_slice %100 {offsets = [0, 3], sizes = [20, 128], strides = [1, 1]} : vector<20x132xf32> to vector<20x128xf32>
    %114 = arith.minimumf %110, %113 : vector<20x128xf32>
    %115 = vector.extract_strided_slice %96 {offsets = [0, 4], sizes = [20, 128], strides = [1, 1]} : vector<20x132xf32> to vector<20x128xf32>
    %116 = arith.maximumf %112, %115 : vector<20x128xf32>
    %117 = vector.extract_strided_slice %100 {offsets = [0, 4], sizes = [20, 128], strides = [1, 1]} : vector<20x132xf32> to vector<20x128xf32>
    %118 = arith.minimumf %114, %117 : vector<20x128xf32>
    %119 = vector.extract_strided_slice %116 {offsets = [0, 0], sizes = [16, 128], strides = [1, 1]} : vector<20x128xf32> to vector<16x128xf32>
    %120 = vector.extract_strided_slice %118 {offsets = [0, 0], sizes = [16, 128], strides = [1, 1]} : vector<20x128xf32> to vector<16x128xf32>
    %121 = vector.extract_strided_slice %116 {offsets = [1, 0], sizes = [16, 128], strides = [1, 1]} : vector<20x128xf32> to vector<16x128xf32>
    %122 = arith.maximumf %119, %121 : vector<16x128xf32>
    %123 = vector.extract_strided_slice %118 {offsets = [1, 0], sizes = [16, 128], strides = [1, 1]} : vector<20x128xf32> to vector<16x128xf32>
    %124 = arith.minimumf %120, %123 : vector<16x128xf32>
    %125 = vector.extract_strided_slice %116 {offsets = [2, 0], sizes = [16, 128], strides = [1, 1]} : vector<20x128xf32> to vector<16x128xf32>
    %126 = arith.maximumf %122, %125 : vector<16x128xf32>
    %127 = vector.extract_strided_slice %118 {offsets = [2, 0], sizes = [16, 128], strides = [1, 1]} : vector<20x128xf32> to vector<16x128xf32>
    %128 = arith.minimumf %124, %127 : vector<16x128xf32>
    %129 = vector.extract_strided_slice %116 {offsets = [3, 0], sizes = [16, 128], strides = [1, 1]} : vector<20x128xf32> to vector<16x128xf32>
    %130 = arith.maximumf %126, %129 : vector<16x128xf32>
    %131 = vector.extract_strided_slice %118 {offsets = [3, 0], sizes = [16, 128], strides = [1, 1]} : vector<20x128xf32> to vector<16x128xf32>
    %132 = arith.minimumf %128, %131 : vector<16x128xf32>
    %133 = vector.extract_strided_slice %116 {offsets = [4, 0], sizes = [16, 128], strides = [1, 1]} : vector<20x128xf32> to vector<16x128xf32>
    %134 = arith.maximumf %130, %133 : vector<16x128xf32>
    %135 = vector.extract_strided_slice %118 {offsets = [4, 0], sizes = [16, 128], strides = [1, 1]} : vector<20x128xf32> to vector<16x128xf32>
    %136 = arith.minimumf %132, %135 : vector<16x128xf32>
    %137 = arith.subf %134, %136 : vector<16x128xf32>
    %c2_17 = arith.constant 2 : index
    %138 = memref.load %arg1[%c2_17] : memref<4xf32, #tpu.memory_space<smem>>
    %139 = vector.broadcast %138 : f32 to vector<16x128xf32>
    %140 = arith.mulf %137, %139 : vector<16x128xf32>
    %141 = arith.addf %94, %140 : vector<16x128xf32>
    %c0_18 = arith.constant 0 : index
    %c3 = arith.constant 3 : index
    %c0_19 = arith.constant 0 : index
    %c0_20 = arith.constant 0 : index
    %142 = vector.load %arg2[%c0_18, %c3, %c0_19, %c0_20] : memref<1x4x20x132xf32, #tpu.memory_space<vmem>>, vector<1x1x20x132xf32>
    %143 = vector.shape_cast %142 : vector<1x1x20x132xf32> to vector<20x132xf32>
    %cst_21 = arith.constant 0xFF800000 : f32
    %144 = vector.broadcast %cst_21 : f32 to vector<20x132xf32>
    %145 = arith.cmpf oeq, %143, %144 : vector<20x132xf32>
    %cst_22 = arith.constant 0x7F800000 : f32
    %146 = vector.broadcast %cst_22 : f32 to vector<20x132xf32>
    %147 = arith.select %145, %146, %143 : vector<20x132xi1>, vector<20x132xf32>
    %148 = vector.extract_strided_slice %143 {offsets = [0, 0], sizes = [20, 128], strides = [1, 1]} : vector<20x132xf32> to vector<20x128xf32>
    %149 = vector.extract_strided_slice %147 {offsets = [0, 0], sizes = [20, 128], strides = [1, 1]} : vector<20x132xf32> to vector<20x128xf32>
    %150 = vector.extract_strided_slice %143 {offsets = [0, 1], sizes = [20, 128], strides = [1, 1]} : vector<20x132xf32> to vector<20x128xf32>
    %151 = arith.maximumf %148, %150 : vector<20x128xf32>
    %152 = vector.extract_strided_slice %147 {offsets = [0, 1], sizes = [20, 128], strides = [1, 1]} : vector<20x132xf32> to vector<20x128xf32>
    %153 = arith.minimumf %149, %152 : vector<20x128xf32>
    %154 = vector.extract_strided_slice %143 {offsets = [0, 2], sizes = [20, 128], strides = [1, 1]} : vector<20x132xf32> to vector<20x128xf32>
    %155 = arith.maximumf %151, %154 : vector<20x128xf32>
    %156 = vector.extract_strided_slice %147 {offsets = [0, 2], sizes = [20, 128], strides = [1, 1]} : vector<20x132xf32> to vector<20x128xf32>
    %157 = arith.minimumf %153, %156 : vector<20x128xf32>
    %158 = vector.extract_strided_slice %143 {offsets = [0, 3], sizes = [20, 128], strides = [1, 1]} : vector<20x132xf32> to vector<20x128xf32>
    %159 = arith.maximumf %155, %158 : vector<20x128xf32>
    %160 = vector.extract_strided_slice %147 {offsets = [0, 3], sizes = [20, 128], strides = [1, 1]} : vector<20x132xf32> to vector<20x128xf32>
    %161 = arith.minimumf %157, %160 : vector<20x128xf32>
    %162 = vector.extract_strided_slice %143 {offsets = [0, 4], sizes = [20, 128], strides = [1, 1]} : vector<20x132xf32> to vector<20x128xf32>
    %163 = arith.maximumf %159, %162 : vector<20x128xf32>
    %164 = vector.extract_strided_slice %147 {offsets = [0, 4], sizes = [20, 128], strides = [1, 1]} : vector<20x132xf32> to vector<20x128xf32>
    %165 = arith.minimumf %161, %164 : vector<20x128xf32>
    %166 = vector.extract_strided_slice %163 {offsets = [0, 0], sizes = [16, 128], strides = [1, 1]} : vector<20x128xf32> to vector<16x128xf32>
    %167 = vector.extract_strided_slice %165 {offsets = [0, 0], sizes = [16, 128], strides = [1, 1]} : vector<20x128xf32> to vector<16x128xf32>
    %168 = vector.extract_strided_slice %163 {offsets = [1, 0], sizes = [16, 128], strides = [1, 1]} : vector<20x128xf32> to vector<16x128xf32>
    %169 = arith.maximumf %166, %168 : vector<16x128xf32>
    %170 = vector.extract_strided_slice %165 {offsets = [1, 0], sizes = [16, 128], strides = [1, 1]} : vector<20x128xf32> to vector<16x128xf32>
    %171 = arith.minimumf %167, %170 : vector<16x128xf32>
    %172 = vector.extract_strided_slice %163 {offsets = [2, 0], sizes = [16, 128], strides = [1, 1]} : vector<20x128xf32> to vector<16x128xf32>
    %173 = arith.maximumf %169, %172 : vector<16x128xf32>
    %174 = vector.extract_strided_slice %165 {offsets = [2, 0], sizes = [16, 128], strides = [1, 1]} : vector<20x128xf32> to vector<16x128xf32>
    %175 = arith.minimumf %171, %174 : vector<16x128xf32>
    %176 = vector.extract_strided_slice %163 {offsets = [3, 0], sizes = [16, 128], strides = [1, 1]} : vector<20x128xf32> to vector<16x128xf32>
    %177 = arith.maximumf %173, %176 : vector<16x128xf32>
    %178 = vector.extract_strided_slice %165 {offsets = [3, 0], sizes = [16, 128], strides = [1, 1]} : vector<20x128xf32> to vector<16x128xf32>
    %179 = arith.minimumf %175, %178 : vector<16x128xf32>
    %180 = vector.extract_strided_slice %163 {offsets = [4, 0], sizes = [16, 128], strides = [1, 1]} : vector<20x128xf32> to vector<16x128xf32>
    %181 = arith.maximumf %177, %180 : vector<16x128xf32>
    %182 = vector.extract_strided_slice %165 {offsets = [4, 0], sizes = [16, 128], strides = [1, 1]} : vector<20x128xf32> to vector<16x128xf32>
    %183 = arith.minimumf %179, %182 : vector<16x128xf32>
    %184 = arith.subf %181, %183 : vector<16x128xf32>
    %c3_23 = arith.constant 3 : index
    %185 = memref.load %arg1[%c3_23] : memref<4xf32, #tpu.memory_space<smem>>
    %186 = vector.broadcast %185 : f32 to vector<16x128xf32>
    %187 = arith.mulf %184, %186 : vector<16x128xf32>
    %188 = arith.addf %141, %187 : vector<16x128xf32>
    %189 = math.exp %188 : vector<16x128xf32>
    %190 = vector.shape_cast %189 : vector<16x128xf32> to vector<1x1x16x128xf32>
    %c0_24 = arith.constant 0 : index
    %c0_25 = arith.constant 0 : index
    %c0_26 = arith.constant 0 : index
    %c0_27 = arith.constant 0 : index
    %191 = vector.load %arg3[%c0_24, %c0_25, %c0_26, %c0_27] : memref<1x1x16x128xf32, #tpu.memory_space<vmem>>, vector<1x1x16x128xf32>
    tpu.vector_store %arg3[%c0_24, %c0_25, %c0_26, %c0_27], %190 {strides = array<i32>} : memref<1x1x16x128xf32, #tpu.memory_space<vmem>>, vector<1x1x16x128xf32>,
    return
  }
  func.func @transform_0(%arg0: i32) -> i32 {
    %c0_i32 = arith.constant 0 : i32
    %c0_i32_0 = arith.constant 0 : i32
    return %c0_i32 : i32
  }
  func.func @transform_1(%arg0: i32) -> (i32, i32, i32, i32) {
    %c0_i32 = arith.constant 0 : i32
    %c0_i32_0 = arith.constant 0 : i32
    %c0_i32_1 = arith.constant 0 : i32
    %c0_i32_2 = arith.constant 0 : i32
    return %arg0, %c0_i32, %c0_i32_0, %c0_i32_1 : i32, i32, i32, i32
  }
  func.func @transform_2(%arg0: i32) -> (i32, i32, i32, i32) {
    %c0_i32 = arith.constant 0 : i32
    %c0_i32_0 = arith.constant 0 : i32
    %c0_i32_1 = arith.constant 0 : i32
    %c0_i32_2 = arith.constant 0 : i32
    return %arg0, %c0_i32, %c0_i32_0, %c0_i32_1 : i32, i32, i32, i32
  }
}

</mosaic_0001>

<llo_original>
// kernel: tpu_custom_call.1
$region0: #{tpu_custom_call.1}
  #allocation0 [shape = 'u32[]', space=smem, size = 0x4, offset = 0x4, fixed_abs, tag = 'smem constant byte address 0x4 - core index']
  #allocation1 [shape = 'u32[72,128]{1,0:T(1,128)}', space=vmem, size = 0x9000, scoped, tag = 'internal scratch']
  %s0 = inlined_call_operand.vmem [shape: f32[4], index: 0, kind: input, shape index: {}]
  %s1 = inlined_call_operand.vmem [shape: f32[2,4,20,132], index: 1, kind: input, shape index: {}]
  %s2 = inlined_call_operand.hbm [shape: f32[2,1,16,128], index: 2, kind: output, shape index: {}]
  %s3 = sld [smem:[#allocation0]]
  $region45: #{tpu_custom_call.1} parent=0
    _
  %s5 = ssub.s32 1, %s3
  %s6 = scalar_select 0, %s5, %s3
  $region1: #{tpu_custom_call.1} parent=0
    #allocation2 [shape = 'u8[512]{0}', space=smem, size = 0x200, scoped, tag = 'input window, operand 0, single buffered']
    #allocation3 [shape = 's32[2]{0}', space=sflag, size = 0x8, scoped, tag = 'scoped memory for tpu_custom_call.1']
    #allocation4 [shape = 's32[2]{0}', space=sflag, size = 0x8, scoped, tag = 'scoped memory for tpu_custom_call.1']
    #allocation5 [shape = 'u8[16384]{0}', space=vmem, size = 0x4000, scoped, tag = 'output window, operand 0']
    %7 = vsyncpa [#allocation4], 0
    %8 = vsyncpa [#allocation3], 0
    %s9 = scalar_lea.sflag [#allocation3], 1
    %10 = vsyncpa %s9, 0
    loop: start=0, step=1, limit=4
    $region2: #{tpu_custom_call.1} parent=1 // loop_pre_header
      _
    $region3: #{tpu_custom_call.1} parent=1 // loop_header
      %s12 = sphi 0, %s16
      %p13 = scmp.ge.s32.totalorder %s12, 4
      %s20 = sphi 0, %s20
      %s22 = sphi 0, %s20
      %s23 = sphi 0, %s22
      %s37 = sphi 0, %s23
      %s43 = sphi 0, %s45
      %s46 = sphi 0, %s43
      %s47 = sphi 0, %s46
      %s63 = sphi 0, %s47
      %s69 = sphi 0, %s71
      %s72 = sphi 0, %s69
      %s73 = sphi 0, %s72
      %s89 = sphi 0, %s73
    $region4: #{tpu_custom_call.1} parent=1 // loop_header_branch
      %15 = sbr.rel (%p13) target = $region8
    $region5: #{tpu_custom_call.1} parent=1 // loop_body
      %s17 = ssub.s32 %s12, 1
      %s18 = ssub.s32 %s12, 2
      %s19 = sadd.s32 %s12, 1
      %s21 = sadd.s32 %s20, 1
      %p24 = scmp.eq.s32.totalorder %s12, 1
      %p25 = scmp.ne.s32.totalorder %s20, %s22
      %p26 = scmp.eq.s32.totalorder %s12, 0
      %p27 = por %p25, %p26
      %p28 = scmp.ne.s32.totalorder %s20, %s22
      %p29 = scmp.eq.s32.totalorder %s17, 1
      %p30 = por %p28, %p29
      %p31 = scmp.ne.s32.totalorder %s22, %s23
      %p32 = scmp.eq.s32.totalorder %s17, 0
      %p33 = por %p31, %p32
      %p34 = scmp.ne.s32.totalorder %s22, %s23
      %p35 = scmp.eq.s32.totalorder %s18, 1
      %p36 = por %p34, %p35
      %p38 = scmp.ne.s32.totalorder %s23, %s37
      %p39 = scmp.eq.s32.totalorder %s18, 0
      %p40 = por %p38, %p39
      %s41 = ssub.s32 %s12, %s19
      %p42 = scmp.eq.s32.totalorder %s41, 0
      %s44 = sadd.s32 %s43, 1
      %s45 = scalar_select %p42, %s43, %s44
      %p48 = pneg %p42
      %p49 = scmp.eq.s32.totalorder %s12, 1
      %p50 = por %p48, %p49
      %p51 = scmp.ne.s32.totalorder %s43, %s46
      %p52 = scmp.eq.s32.totalorder %s12, 0
      %p53 = por %p51, %p52
      %p54 = scmp.ne.s32.totalorder %s43, %s46
      %p55 = scmp.eq.s32.totalorder %s17, 1
      %p56 = por %p54, %p55
      %p57 = scmp.ne.s32.totalorder %s46, %s47
      %p58 = scmp.eq.s32.totalorder %s17, 0
      %p59 = por %p57, %p58
      %p60 = scmp.ne.s32.totalorder %s46, %s47
      %p61 = scmp.eq.s32.totalorder %s18, 1
      %p62 = por %p60, %p61
      %p64 = scmp.ne.s32.totalorder %s47, %s63
      %p65 = scmp.eq.s32.totalorder %s18, 0
      %p66 = por %p64, %p65
      %s67 = ssub.s32 %s12, %s19
      %p68 = scmp.eq.s32.totalorder %s67, 0
      %s70 = sadd.s32 %s69, 1
      %s71 = scalar_select %p68, %s69, %s70
      %p74 = pneg %p68
      %p75 = scmp.eq.s32.totalorder %s12, 1
      %p76 = por %p74, %p75
      %p77 = scmp.ne.s32.totalorder %s69, %s72
      %p78 = scmp.eq.s32.totalorder %s12, 0
      %p79 = por %p77, %p78
      %p80 = scmp.ne.s32.totalorder %s69, %s72
      %p81 = scmp.eq.s32.totalorder %s17, 1
      %p82 = por %p80, %p81
      %p83 = scmp.ne.s32.totalorder %s72, %s73
      %p84 = scmp.eq.s32.totalorder %s17, 0
      %p85 = por %p83, %p84
      %p86 = scmp.ne.s32.totalorder %s72, %s73
      %p87 = scmp.eq.s32.totalorder %s18, 1
      %p88 = por %p86, %p87
      %p90 = scmp.ne.s32.totalorder %s73, %s89
      %p91 = scmp.eq.s32.totalorder %s18, 0
      %p92 = por %p90, %p91
      %p93 = scmp.le.s32.totalorder 1, %s12
      %p94 = scmp.lt.s32.totalorder %s12, 3
      %p95 = pnand %p93, %p94
      %p96 = pneg %p95
      // Predicated region
      $region9: #{tpu_custom_call.1} parent=5 // pred_check
        _
      $region10: #{tpu_custom_call.1} parent=5 // pred_check_branch
        %98 = sbr.rel (%p95) target = $region12
      $region11: #{tpu_custom_call.1} parent=5 // pred_region
        %s99 = ssub.s32 %s12, 1
        // Predicated region
        $region13: #{tpu_custom_call.1} parent=11 // pred_check
          %p100 = pneg %p33
        $region14: #{tpu_custom_call.1} parent=11 // pred_check_branch
          %102 = sbr.rel (%p100) target = $region16
        $region15: #{tpu_custom_call.1} parent=11 // pred_region
          %104 = vsyncadd [#allocation4], 0
          %s106 = sshll.u32 %s0, 4
          %s107 = int_to_ptr.vmem [resolvable:$true] %s106
          %109 = dma.vmem_to_smem %s107, 16, [#allocation2], [#allocation4]
        $region16: #{tpu_custom_call.1} parent=11 // pred_fallthru
          _
      $region12: #{tpu_custom_call.1} parent=5 // pred_fallthru
        _
      %p110 = scmp.lt.s32.totalorder %s12, 2
      // Predicated region
      $region17: #{tpu_custom_call.1} parent=5 // pred_check
        %p111 = pneg %p110
      $region18: #{tpu_custom_call.1} parent=5 // pred_check_branch
        %113 = sbr.rel (%p111) target = $region20
      $region19: #{tpu_custom_call.1} parent=5 // pred_region
        // Predicated region
        $region21: #{tpu_custom_call.1} parent=19 // pred_check
          %p114 = pneg %p53
        $region22: #{tpu_custom_call.1} parent=19 // pred_check_branch
          %116 = sbr.rel (%p114) target = $region24
        $region23: #{tpu_custom_call.1} parent=19 // pred_region
          %p117 = scmp.lt.s32.totalorder %s12, 1
          %s118 = scalar_select %p117, %s12, 1
          %s119 = smul.addr %s118, 24
          %s120 = smul.addr %s119, 8
          %s121 = scalar_lea.vmem %s1, %s120
        $region24: #{tpu_custom_call.1} parent=19 // pred_fallthru
          _
      $region20: #{tpu_custom_call.1} parent=5 // pred_fallthru
        _
      %p122 = scmp.le.s32.totalorder 1, %s12
      %p123 = scmp.lt.s32.totalorder %s12, 3
      %p124 = pnand %p122, %p123
      %p125 = pneg %p124
      // Predicated region
      $region25: #{tpu_custom_call.1} parent=5 // pred_check
        _
      $region26: #{tpu_custom_call.1} parent=5 // pred_check_branch
        %127 = sbr.rel (%p124) target = $region28
      $region27: #{tpu_custom_call.1} parent=5 // pred_region
        %s128 = ssub.s32 %s12, 1
        // Predicated region
        $region29: #{tpu_custom_call.1} parent=27 // pred_check
          %p129 = pneg %p33
        $region30: #{tpu_custom_call.1} parent=27 // pred_check_branch
          %131 = sbr.rel (%p129) target = $region32
        $region31: #{tpu_custom_call.1} parent=27 // pred_region
          %133 = dma.done [#allocation4], 16
        $region32: #{tpu_custom_call.1} parent=27 // pred_fallthru
          _
        %134 = sfence
        %p135 = pneg %p33
        %p136 = pneg %p30
        %p137 = scmp.lt.s32.totalorder %s17, 1
        %s138 = scalar_select %p137, %s17, 1
        %s139 = smul.addr %s138, 24
        %s140 = smul.addr %s139, 8
        %s141 = scalar_lea.vmem %s1, %s140
        %p142 = pneg %p59
        %p143 = pneg %p56
        %p144 = pneg %p85
        %p145 = pneg %p82
        %s146 = sand.u32 %s72, 1
        %s147 = scalar_lea.sflag [#allocation3], %s146
        %s148 = sand.u32 %s72, 1
        %s149 = smul.addr %s148, 16
        %s150 = scalar_lea.vmem [#allocation5], %s149
        %p151 = scmp.lt.s32.totalorder %s17, 1
        %s152 = scalar_select %p151, %s17, 1
        %s153 = smul.addr %s152, 24
        %s154 = smul.addr %s153, 8
        %s155 = scalar_lea.vmem %s1, %s154
        %v156 = vld [vmem:[%s155] sm:$0xff]
        %v157 = vld [vmem:[%s155 + $0x8] sm:$0xff]
        %v158 = vld [vmem:[%s155 + $0x10] sm:$0xff]
        %v159 = vld [vmem:[%s155 + $0x18] sm:$0xff]
        %v160 = vld [vmem:[%s155 + $0x20] sm:$0xf]
        %v161 = vld [vmem:[%s155 + $0x28] sm:$0xf]
        %vm162 = vcmp.eq.f32.partialorder %v156, -inf
        %vm163 = vcmp.eq.f32.partialorder %v157, -inf
        %vm164 = vcmp.eq.f32.partialorder %v158, -inf
        %vm165 = vcmp.eq.f32.partialorder %v159, -inf
        %vm166 = vcmp.eq.f32.partialorder %v160, -inf
        %vm167 = vcmp.eq.f32.partialorder %v161, -inf
        %v168 = vsel %vm162, inf, %v156
        %v169 = vsel %vm163, inf, %v157
        %v170 = vsel %vm164, inf, %v158
        %v171 = vsel %vm165, inf, %v159
        %v172 = vsel %vm166, inf, %v160
        %v173 = vsel %vm167, inf, %v161
        %180 = vrot.lane.b32.xlu0 %v156, 127
        %v181 = vpop.permute.xlu0 %180
        %182 = vrot.lane.b32.xlu0 %v157, 127
        %v183 = vpop.permute.xlu0 %182
        %184 = vrot.lane.b32.xlu0 %v158, 127
        %v185 = vpop.permute.xlu0 %184
        %186 = vrot.lane.b32.xlu0 %v159, 127
        %v187 = vpop.permute.xlu0 %186
        %188 = vrot.lane.b32.xlu0 %v160, 127
        %v189 = vpop.permute.xlu0 %188
        %190 = vrot.lane.b32.xlu0 %v161, 127
        %v191 = vpop.permute.xlu0 %190
        %vm192 = vcmask 1039360
        %v193 = vsel %vm192, %v181, %v183
        %v194 = vsel %vm192, %v185, %v187
        %v195 = vsel %vm192, %v189, %v191
        %v199 = vmax.f32 %v156, %v193
        %v200 = vmax.f32 %v158, %v194
        %v201 = vmax.f32 %v160, %v195
        %208 = vrot.lane.b32.xlu0 %v168, 127
        %v209 = vpop.permute.xlu0 %208
        %210 = vrot.lane.b32.xlu0 %v169, 127
        %v211 = vpop.permute.xlu0 %210
        %212 = vrot.lane.b32.xlu0 %v170, 127
        %v213 = vpop.permute.xlu0 %212
        %214 = vrot.lane.b32.xlu0 %v171, 127
        %v215 = vpop.permute.xlu0 %214
        %216 = vrot.lane.b32.xlu0 %v172, 127
        %v217 = vpop.permute.xlu0 %216
        %218 = vrot.lane.b32.xlu0 %v173, 127
        %v219 = vpop.permute.xlu0 %218
        %v220 = vsel %vm192, %v209, %v211
        %v221 = vsel %vm192, %v213, %v215
        %v222 = vsel %vm192, %v217, %v219
        %v226 = vmin.f32 %v168, %v220
        %v227 = vmin.f32 %v170, %v221
        %v228 = vmin.f32 %v172, %v222
        %229 = vrot.lane.b32.xlu0 %v156, 126
        %v230 = vpop.permute.xlu0 %229
        %231 = vrot.lane.b32.xlu0 %v157, 126
        %v232 = vpop.permute.xlu0 %231
        %233 = vrot.lane.b32.xlu0 %v158, 126
        %v234 = vpop.permute.xlu0 %233
        %235 = vrot.lane.b32.xlu0 %v159, 126
        %v236 = vpop.permute.xlu0 %235
        %237 = vrot.lane.b32.xlu0 %v160, 126
        %v238 = vpop.permute.xlu0 %237
        %239 = vrot.lane.b32.xlu0 %v161, 126
        %v240 = vpop.permute.xlu0 %239
        %vm241 = vcmask 1031168
        %v242 = vsel %vm241, %v230, %v232
        %v243 = vsel %vm241, %v234, %v236
        %v244 = vsel %vm241, %v238, %v240
        %v248 = vmax.f32 %v199, %v242
        %v249 = vmax.f32 %v200, %v243
        %v250 = vmax.f32 %v201, %v244
        %251 = vrot.lane.b32.xlu0 %v168, 126
        %v252 = vpop.permute.xlu0 %251
        %253 = vrot.lane.b32.xlu0 %v169, 126
        %v254 = vpop.permute.xlu0 %253
        %255 = vrot.lane.b32.xlu0 %v170, 126
        %v256 = vpop.permute.xlu0 %255
        %257 = vrot.lane.b32.xlu0 %v171, 126
        %v258 = vpop.permute.xlu0 %257
        %259 = vrot.lane.b32.xlu0 %v172, 126
        %v260 = vpop.permute.xlu0 %259
        %261 = vrot.lane.b32.xlu0 %v173, 126
        %v262 = vpop.permute.xlu0 %261
        %v263 = vsel %vm241, %v252, %v254
        %v264 = vsel %vm241, %v256, %v258
        %v265 = vsel %vm241, %v260, %v262
        %v269 = vmin.f32 %v226, %v263
        %v270 = vmin.f32 %v227, %v264
        %v271 = vmin.f32 %v228, %v265
        %272 = vrot.lane.b32.xlu0 %v156, 125
        %v273 = vpop.permute.xlu0 %272
        %274 = vrot.lane.b32.xlu0 %v157, 125
        %v275 = vpop.permute.xlu0 %274
        %276 = vrot.lane.b32.xlu0 %v158, 125
        %v277 = vpop.permute.xlu0 %276
        %278 = vrot.lane.b32.xlu0 %v159, 125
        %v279 = vpop.permute.xlu0 %278
        %280 = vrot.lane.b32.xlu0 %v160, 125
        %v281 = vpop.permute.xlu0 %280
        %282 = vrot.lane.b32.xlu0 %v161, 125
        %v283 = vpop.permute.xlu0 %282
        %vm284 = vcmask 1022976
        %v285 = vsel %vm284, %v273, %v275
        %v286 = vsel %vm284, %v277, %v279
        %v287 = vsel %vm284, %v281, %v283
        %v291 = vmax.f32 %v248, %v285
        %v292 = vmax.f32 %v249, %v286
        %v293 = vmax.f32 %v250, %v287
        %294 = vrot.lane.b32.xlu0 %v168, 125
        %v295 = vpop.permute.xlu0 %294
        %296 = vrot.lane.b32.xlu0 %v169, 125
        %v297 = vpop.permute.xlu0 %296
        %298 = vrot.lane.b32.xlu0 %v170, 125
        %v299 = vpop.permute.xlu0 %298
        %300 = vrot.lane.b32.xlu0 %v171, 125
        %v301 = vpop.permute.xlu0 %300
        %302 = vrot.lane.b32.xlu0 %v172, 125
        %v303 = vpop.permute.xlu0 %302
        %304 = vrot.lane.b32.xlu0 %v173, 125
        %v305 = vpop.permute.xlu0 %304
        %v306 = vsel %vm284, %v295, %v297
        %v307 = vsel %vm284, %v299, %v301
        %v308 = vsel %vm284, %v303, %v305
        %v312 = vmin.f32 %v269, %v306
        %v313 = vmin.f32 %v270, %v307
        %v314 = vmin.f32 %v271, %v308
        %315 = vrot.lane.b32.xlu0 %v156, 124
        %v316 = vpop.permute.xlu0 %315
        %317 = vrot.lane.b32.xlu0 %v157, 124
        %v318 = vpop.permute.xlu0 %317
        %319 = vrot.lane.b32.xlu0 %v158, 124
        %v320 = vpop.permute.xlu0 %319
        %321 = vrot.lane.b32.xlu0 %v159, 124
        %v322 = vpop.permute.xlu0 %321
        %323 = vrot.lane.b32.xlu0 %v160, 124
        %v324 = vpop.permute.xlu0 %323
        %325 = vrot.lane.b32.xlu0 %v161, 124
        %v326 = vpop.permute.xlu0 %325
        %vm327 = vcmask 1014784
        %v328 = vsel %vm327, %v316, %v318
        %v329 = vsel %vm327, %v320, %v322
        %v330 = vsel %vm327, %v324, %v326
        %v334 = vmax.f32 %v291, %v328
        %v335 = vmax.f32 %v292, %v329
        %v336 = vmax.f32 %v293, %v330
        %337 = vrot.lane.b32.xlu0 %v168, 124
        %v338 = vpop.permute.xlu0 %337
        %339 = vrot.lane.b32.xlu0 %v169, 124
        %v340 = vpop.permute.xlu0 %339
        %341 = vrot.lane.b32.xlu0 %v170, 124
        %v342 = vpop.permute.xlu0 %341
        %343 = vrot.lane.b32.xlu0 %v171, 124
        %v344 = vpop.permute.xlu0 %343
        %345 = vrot.lane.b32.xlu0 %v172, 124
        %v346 = vpop.permute.xlu0 %345
        %347 = vrot.lane.b32.xlu0 %v173, 124
        %v348 = vpop.permute.xlu0 %347
        %v349 = vsel %vm327, %v338, %v340
        %v350 = vsel %vm327, %v342, %v344
        %v351 = vsel %vm327, %v346, %v348
        %v355 = vmin.f32 %v312, %v349
        %v356 = vmin.f32 %v313, %v350
        %v357 = vmin.f32 %v314, %v351
        %vm361 = vcmask 1046528
        %v362 = vrot.slane %v334, 1
        %v363 = vrot.slane %v335, 1
        %v364 = vsel %vm361, %v362, %v363
        %v365 = vrot.slane %v336, 1
        %v366 = vsel %vm361, %v363, %v365
        %v369 = vmax.f32 %v334, %v364
        %v370 = vmax.f32 %v335, %v366
        %v374 = vrot.slane %v355, 1
        %v375 = vrot.slane %v356, 1
        %v376 = vsel %vm361, %v374, %v375
        %v377 = vrot.slane %v357, 1
        %v378 = vsel %vm361, %v375, %v377
        %v381 = vmin.f32 %v355, %v376
        %v382 = vmin.f32 %v356, %v378
        %vm383 = vcmask 1045504
        %v384 = vrot.slane %v334, 2
        %v385 = vrot.slane %v335, 2
        %v386 = vsel %vm383, %v384, %v385
        %v387 = vrot.slane %v336, 2
        %v388 = vsel %vm383, %v385, %v387
        %v391 = vmax.f32 %v369, %v386
        %v392 = vmax.f32 %v370, %v388
        %v393 = vrot.slane %v355, 2
        %v394 = vrot.slane %v356, 2
        %v395 = vsel %vm383, %v393, %v394
        %v396 = vrot.slane %v357, 2
        %v397 = vsel %vm383, %v394, %v396
        %v400 = vmin.f32 %v381, %v395
        %v401 = vmin.f32 %v382, %v397
        %vm402 = vcmask 1044480
        %v403 = vrot.slane %v334, 3
        %v404 = vrot.slane %v335, 3
        %v405 = vsel %vm402, %v403, %v404
        %v406 = vrot.slane %v336, 3
        %v407 = vsel %vm402, %v404, %v406
        %v410 = vmax.f32 %v391, %v405
        %v411 = vmax.f32 %v392, %v407
        %v412 = vrot.slane %v355, 3
        %v413 = vrot.slane %v356, 3
        %v414 = vsel %vm402, %v412, %v413
        %v415 = vrot.slane %v357, 3
        %v416 = vsel %vm402, %v413, %v415
        %v419 = vmin.f32 %v400, %v414
        %v420 = vmin.f32 %v401, %v416
        %vm421 = vcmask 1043456
        %v422 = vrot.slane %v334, 4
        %v423 = vrot.slane %v335, 4
        %v424 = vsel %vm421, %v422, %v423
        %v425 = vrot.slane %v336, 4
        %v426 = vsel %vm421, %v423, %v425
        %v429 = vmax.f32 %v410, %v424
        %v430 = vmax.f32 %v411, %v426
        %v431 = vrot.slane %v355, 4
        %v432 = vrot.slane %v356, 4
        %v433 = vsel %vm421, %v431, %v432
        %v434 = vrot.slane %v357, 4
        %v435 = vsel %vm421, %v432, %v434
        %v438 = vmin.f32 %v419, %v433
        %v439 = vmin.f32 %v420, %v435
        %v440 = vsub.f32 %v429, %v438
        %v441 = vsub.f32 %v430, %v439
        %s442 = sld [smem:[#allocation2]]
        %v443 = vstv %s442
        %v444 = vmul.f32 %v440, %v443
        %v445 = vmul.f32 %v441, %v443
        %v446 = vadd.f32 %v444, 0.0
        %v447 = vadd.f32 %v445, 0.0
        %s448 = scalar_lea.vmem %s155, 48
        %v449 = vld [vmem:[%s448] sm:$0xff]
        %v450 = vld [vmem:[%s448 + $0x8] sm:$0xff]
        %v451 = vld [vmem:[%s448 + $0x10] sm:$0xff]
        %v452 = vld [vmem:[%s448 + $0x18] sm:$0xff]
        %v453 = vld [vmem:[%s448 + $0x20] sm:$0xf]
        %v454 = vld [vmem:[%s448 + $0x28] sm:$0xf]
        %vm455 = vcmp.eq.f32.partialorder %v449, -inf
        %vm456 = vcmp.eq.f32.partialorder %v450, -inf
        %vm457 = vcmp.eq.f32.partialorder %v451, -inf
        %vm458 = vcmp.eq.f32.partialorder %v452, -inf
        %vm459 = vcmp.eq.f32.partialorder %v453, -inf
        %vm460 = vcmp.eq.f32.partialorder %v454, -inf
        %v461 = vsel %vm455, inf, %v449
        %v462 = vsel %vm456, inf, %v450
        %v463 = vsel %vm457, inf, %v451
        %v464 = vsel %vm458, inf, %v452
        %v465 = vsel %vm459, inf, %v453
        %v466 = vsel %vm460, inf, %v454
        %473 = vrot.lane.b32.xlu0 %v449, 127
        %v474 = vpop.permute.xlu0 %473
        %475 = vrot.lane.b32.xlu0 %v450, 127
        %v476 = vpop.permute.xlu0 %475
        %477 = vrot.lane.b32.xlu0 %v451, 127
        %v478 = vpop.permute.xlu0 %477
        %479 = vrot.lane.b32.xlu0 %v452, 127
        %v480 = vpop.permute.xlu0 %479
        %481 = vrot.lane.b32.xlu0 %v453, 127
        %v482 = vpop.permute.xlu0 %481
        %483 = vrot.lane.b32.xlu0 %v454, 127
        %v484 = vpop.permute.xlu0 %483
        %v485 = vsel %vm192, %v474, %v476
        %v486 = vsel %vm192, %v478, %v480
        %v487 = vsel %vm192, %v482, %v484
        %v491 = vmax.f32 %v449, %v485
        %v492 = vmax.f32 %v451, %v486
        %v493 = vmax.f32 %v453, %v487
        %500 = vrot.lane.b32.xlu0 %v461, 127
        %v501 = vpop.permute.xlu0 %500
        %502 = vrot.lane.b32.xlu0 %v462, 127
        %v503 = vpop.permute.xlu0 %502
        %504 = vrot.lane.b32.xlu0 %v463, 127
        %v505 = vpop.permute.xlu0 %504
        %506 = vrot.lane.b32.xlu0 %v464, 127
        %v507 = vpop.permute.xlu0 %506
        %508 = vrot.lane.b32.xlu0 %v465, 127
        %v509 = vpop.permute.xlu0 %508
        %510 = vrot.lane.b32.xlu0 %v466, 127
        %v511 = vpop.permute.xlu0 %510
        %v512 = vsel %vm192, %v501, %v503
        %v513 = vsel %vm192, %v505, %v507
        %v514 = vsel %vm192, %v509, %v511
        %v518 = vmin.f32 %v461, %v512
        %v519 = vmin.f32 %v463, %v513
        %v520 = vmin.f32 %v465, %v514
        %521 = vrot.lane.b32.xlu0 %v449, 126
        %v522 = vpop.permute.xlu0 %521
        %523 = vrot.lane.b32.xlu0 %v450, 126
        %v524 = vpop.permute.xlu0 %523
        %525 = vrot.lane.b32.xlu0 %v451, 126
        %v526 = vpop.permute.xlu0 %525
        %527 = vrot.lane.b32.xlu0 %v452, 126
        %v528 = vpop.permute.xlu0 %527
        %529 = vrot.lane.b32.xlu0 %v453, 126
        %v530 = vpop.permute.xlu0 %529
        %531 = vrot.lane.b32.xlu0 %v454, 126
        %v532 = vpop.permute.xlu0 %531
        %v533 = vsel %vm241, %v522, %v524
        %v534 = vsel %vm241, %v526, %v528
        %v535 = vsel %vm241, %v530, %v532
        %v539 = vmax.f32 %v491, %v533
        %v540 = vmax.f32 %v492, %v534
        %v541 = vmax.f32 %v493, %v535
        %542 = vrot.lane.b32.xlu0 %v461, 126
        %v543 = vpop.permute.xlu0 %542
        %544 = vrot.lane.b32.xlu0 %v462, 126
        %v545 = vpop.permute.xlu0 %544
        %546 = vrot.lane.b32.xlu0 %v463, 126
        %v547 = vpop.permute.xlu0 %546
        %548 = vrot.lane.b32.xlu0 %v464, 126
        %v549 = vpop.permute.xlu0 %548
        %550 = vrot.lane.b32.xlu0 %v465, 126
        %v551 = vpop.permute.xlu0 %550
        %552 = vrot.lane.b32.xlu0 %v466, 126
        %v553 = vpop.permute.xlu0 %552
        %v554 = vsel %vm241, %v543, %v545
        %v555 = vsel %vm241, %v547, %v549
        %v556 = vsel %vm241, %v551, %v553
        %v560 = vmin.f32 %v518, %v554
        %v561 = vmin.f32 %v519, %v555
        %v562 = vmin.f32 %v520, %v556
        %563 = vrot.lane.b32.xlu0 %v449, 125
        %v564 = vpop.permute.xlu0 %563
        %565 = vrot.lane.b32.xlu0 %v450, 125
        %v566 = vpop.permute.xlu0 %565
        %567 = vrot.lane.b32.xlu0 %v451, 125
        %v568 = vpop.permute.xlu0 %567
        %569 = vrot.lane.b32.xlu0 %v452, 125
        %v570 = vpop.permute.xlu0 %569
        %571 = vrot.lane.b32.xlu0 %v453, 125
        %v572 = vpop.permute.xlu0 %571
        %573 = vrot.lane.b32.xlu0 %v454, 125
        %v574 = vpop.permute.xlu0 %573
        %v575 = vsel %vm284, %v564, %v566
        %v576 = vsel %vm284, %v568, %v570
        %v577 = vsel %vm284, %v572, %v574
        %v581 = vmax.f32 %v539, %v575
        %v582 = vmax.f32 %v540, %v576
        %v583 = vmax.f32 %v541, %v577
        %584 = vrot.lane.b32.xlu0 %v461, 125
        %v585 = vpop.permute.xlu0 %584
        %586 = vrot.lane.b32.xlu0 %v462, 125
        %v587 = vpop.permute.xlu0 %586
        %588 = vrot.lane.b32.xlu0 %v463, 125
        %v589 = vpop.permute.xlu0 %588
        %590 = vrot.lane.b32.xlu0 %v464, 125
        %v591 = vpop.permute.xlu0 %590
        %592 = vrot.lane.b32.xlu0 %v465, 125
        %v593 = vpop.permute.xlu0 %592
        %594 = vrot.lane.b32.xlu0 %v466, 125
        %v595 = vpop.permute.xlu0 %594
        %v596 = vsel %vm284, %v585, %v587
        %v597 = vsel %vm284, %v589, %v591
        %v598 = vsel %vm284, %v593, %v595
        %v602 = vmin.f32 %v560, %v596
        %v603 = vmin.f32 %v561, %v597
        %v604 = vmin.f32 %v562, %v598
        %605 = vrot.lane.b32.xlu0 %v449, 124
        %v606 = vpop.permute.xlu0 %605
        %607 = vrot.lane.b32.xlu0 %v450, 124
        %v608 = vpop.permute.xlu0 %607
        %609 = vrot.lane.b32.xlu0 %v451, 124
        %v610 = vpop.permute.xlu0 %609
        %611 = vrot.lane.b32.xlu0 %v452, 124
        %v612 = vpop.permute.xlu0 %611
        %613 = vrot.lane.b32.xlu0 %v453, 124
        %v614 = vpop.permute.xlu0 %613
        %615 = vrot.lane.b32.xlu0 %v454, 124
        %v616 = vpop.permute.xlu0 %615
        %v617 = vsel %vm327, %v606, %v608
        %v618 = vsel %vm327, %v610, %v612
        %v619 = vsel %vm327, %v614, %v616
        %v623 = vmax.f32 %v581, %v617
        %v624 = vmax.f32 %v582, %v618
        %v625 = vmax.f32 %v583, %v619
        %626 = vrot.lane.b32.xlu0 %v461, 124
        %v627 = vpop.permute.xlu0 %626
        %628 = vrot.lane.b32.xlu0 %v462, 124
        %v629 = vpop.permute.xlu0 %628
        %630 = vrot.lane.b32.xlu0 %v463, 124
        %v631 = vpop.permute.xlu0 %630
        %632 = vrot.lane.b32.xlu0 %v464, 124
        %v633 = vpop.permute.xlu0 %632
        %634 = vrot.lane.b32.xlu0 %v465, 124
        %v635 = vpop.permute.xlu0 %634
        %636 = vrot.lane.b32.xlu0 %v466, 124
        %v637 = vpop.permute.xlu0 %636
        %v638 = vsel %vm327, %v627, %v629
        %v639 = vsel %vm327, %v631, %v633
        %v640 = vsel %vm327, %v635, %v637
        %v644 = vmin.f32 %v602, %v638
        %v645 = vmin.f32 %v603, %v639
        %v646 = vmin.f32 %v604, %v640
        %v650 = vrot.slane %v623, 1
        %v651 = vrot.slane %v624, 1
        %v652 = vsel %vm361, %v650, %v651
        %v653 = vrot.slane %v625, 1
        %v654 = vsel %vm361, %v651, %v653
        %v657 = vmax.f32 %v623, %v652
        %v658 = vmax.f32 %v624, %v654
        %v662 = vrot.slane %v644, 1
        %v663 = vrot.slane %v645, 1
        %v664 = vsel %vm361, %v662, %v663
        %v665 = vrot.slane %v646, 1
        %v666 = vsel %vm361, %v663, %v665
        %v669 = vmin.f32 %v644, %v664
        %v670 = vmin.f32 %v645, %v666
        %v671 = vrot.slane %v623, 2
        %v672 = vrot.slane %v624, 2
        %v673 = vsel %vm383, %v671, %v672
        %v674 = vrot.slane %v625, 2
        %v675 = vsel %vm383, %v672, %v674
        %v678 = vmax.f32 %v657, %v673
        %v679 = vmax.f32 %v658, %v675
        %v680 = vrot.slane %v644, 2
        %v681 = vrot.slane %v645, 2
        %v682 = vsel %vm383, %v680, %v681
        %v683 = vrot.slane %v646, 2
        %v684 = vsel %vm383, %v681, %v683
        %v687 = vmin.f32 %v669, %v682
        %v688 = vmin.f32 %v670, %v684
        %v689 = vrot.slane %v623, 3
        %v690 = vrot.slane %v624, 3
        %v691 = vsel %vm402, %v689, %v690
        %v692 = vrot.slane %v625, 3
        %v693 = vsel %vm402, %v690, %v692
        %v696 = vmax.f32 %v678, %v691
        %v697 = vmax.f32 %v679, %v693
        %v698 = vrot.slane %v644, 3
        %v699 = vrot.slane %v645, 3
        %v700 = vsel %vm402, %v698, %v699
        %v701 = vrot.slane %v646, 3
        %v702 = vsel %vm402, %v699, %v701
        %v705 = vmin.f32 %v687, %v700
        %v706 = vmin.f32 %v688, %v702
        %v707 = vrot.slane %v623, 4
        %v708 = vrot.slane %v624, 4
        %v709 = vsel %vm421, %v707, %v708
        %v710 = vrot.slane %v625, 4
        %v711 = vsel %vm421, %v708, %v710
        %v714 = vmax.f32 %v696, %v709
        %v715 = vmax.f32 %v697, %v711
        %v716 = vrot.slane %v644, 4
        %v717 = vrot.slane %v645, 4
        %v718 = vsel %vm421, %v716, %v717
        %v719 = vrot.slane %v646, 4
        %v720 = vsel %vm421, %v717, %v719
        %v723 = vmin.f32 %v705, %v718
        %v724 = vmin.f32 %v706, %v720
        %v725 = vsub.f32 %v714, %v723
        %v726 = vsub.f32 %v715, %v724
        %s727 = sld [smem:[#allocation2 + $0x1]]
        %v728 = vstv %s727
        %v729 = vmul.f32 %v725, %v728
        %v730 = vmul.f32 %v726, %v728
        %v731 = vadd.f32 %v446, %v729
        %v732 = vadd.f32 %v447, %v730
        %s733 = scalar_lea.vmem %s155, 96
        %v734 = vld [vmem:[%s733] sm:$0xff]
        %v735 = vld [vmem:[%s733 + $0x8] sm:$0xff]
        %v736 = vld [vmem:[%s733 + $0x10] sm:$0xff]
        %v737 = vld [vmem:[%s733 + $0x18] sm:$0xff]
        %v738 = vld [vmem:[%s733 + $0x20] sm:$0xf]
        %v739 = vld [vmem:[%s733 + $0x28] sm:$0xf]
        %vm740 = vcmp.eq.f32.partialorder %v734, -inf
        %vm741 = vcmp.eq.f32.partialorder %v735, -inf
        %vm742 = vcmp.eq.f32.partialorder %v736, -inf
        %vm743 = vcmp.eq.f32.partialorder %v737, -inf
        %vm744 = vcmp.eq.f32.partialorder %v738, -inf
        %vm745 = vcmp.eq.f32.partialorder %v739, -inf
        %v746 = vsel %vm740, inf, %v734
        %v747 = vsel %vm741, inf, %v735
        %v748 = vsel %vm742, inf, %v736
        %v749 = vsel %vm743, inf, %v737
        %v750 = vsel %vm744, inf, %v738
        %v751 = vsel %vm745, inf, %v739
        %758 = vrot.lane.b32.xlu0 %v734, 127
        %v759 = vpop.permute.xlu0 %758
        %760 = vrot.lane.b32.xlu0 %v735, 127
        %v761 = vpop.permute.xlu0 %760
        %762 = vrot.lane.b32.xlu0 %v736, 127
        %v763 = vpop.permute.xlu0 %762
        %764 = vrot.lane.b32.xlu0 %v737, 127
        %v765 = vpop.permute.xlu0 %764
        %766 = vrot.lane.b32.xlu0 %v738, 127
        %v767 = vpop.permute.xlu0 %766
        %768 = vrot.lane.b32.xlu0 %v739, 127
        %v769 = vpop.permute.xlu0 %768
        %v770 = vsel %vm192, %v759, %v761
        %v771 = vsel %vm192, %v763, %v765
        %v772 = vsel %vm192, %v767, %v769
        %v776 = vmax.f32 %v734, %v770
        %v777 = vmax.f32 %v736, %v771
        %v778 = vmax.f32 %v738, %v772
        %785 = vrot.lane.b32.xlu0 %v746, 127
        %v786 = vpop.permute.xlu0 %785
        %787 = vrot.lane.b32.xlu0 %v747, 127
        %v788 = vpop.permute.xlu0 %787
        %789 = vrot.lane.b32.xlu0 %v748, 127
        %v790 = vpop.permute.xlu0 %789
        %791 = vrot.lane.b32.xlu0 %v749, 127
        %v792 = vpop.permute.xlu0 %791
        %793 = vrot.lane.b32.xlu0 %v750, 127
        %v794 = vpop.permute.xlu0 %793
        %795 = vrot.lane.b32.xlu0 %v751, 127
        %v796 = vpop.permute.xlu0 %795
        %v797 = vsel %vm192, %v786, %v788
        %v798 = vsel %vm192, %v790, %v792
        %v799 = vsel %vm192, %v794, %v796
        %v803 = vmin.f32 %v746, %v797
        %v804 = vmin.f32 %v748, %v798
        %v805 = vmin.f32 %v750, %v799
        %806 = vrot.lane.b32.xlu0 %v734, 126
        %v807 = vpop.permute.xlu0 %806
        %808 = vrot.lane.b32.xlu0 %v735, 126
        %v809 = vpop.permute.xlu0 %808
        %810 = vrot.lane.b32.xlu0 %v736, 126
        %v811 = vpop.permute.xlu0 %810
        %812 = vrot.lane.b32.xlu0 %v737, 126
        %v813 = vpop.permute.xlu0 %812
        %814 = vrot.lane.b32.xlu0 %v738, 126
        %v815 = vpop.permute.xlu0 %814
        %816 = vrot.lane.b32.xlu0 %v739, 126
        %v817 = vpop.permute.xlu0 %816
        %v818 = vsel %vm241, %v807, %v809
        %v819 = vsel %vm241, %v811, %v813
        %v820 = vsel %vm241, %v815, %v817
        %v824 = vmax.f32 %v776, %v818
        %v825 = vmax.f32 %v777, %v819
        %v826 = vmax.f32 %v778, %v820
        %827 = vrot.lane.b32.xlu0 %v746, 126
        %v828 = vpop.permute.xlu0 %827
        %829 = vrot.lane.b32.xlu0 %v747, 126
        %v830 = vpop.permute.xlu0 %829
        %831 = vrot.lane.b32.xlu0 %v748, 126
        %v832 = vpop.permute.xlu0 %831
        %833 = vrot.lane.b32.xlu0 %v749, 126
        %v834 = vpop.permute.xlu0 %833
        %835 = vrot.lane.b32.xlu0 %v750, 126
        %v836 = vpop.permute.xlu0 %835
        %837 = vrot.lane.b32.xlu0 %v751, 126
        %v838 = vpop.permute.xlu0 %837
        %v839 = vsel %vm241, %v828, %v830
        %v840 = vsel %vm241, %v832, %v834
        %v841 = vsel %vm241, %v836, %v838
        %v845 = vmin.f32 %v803, %v839
        %v846 = vmin.f32 %v804, %v840
        %v847 = vmin.f32 %v805, %v841
        %848 = vrot.lane.b32.xlu0 %v734, 125
        %v849 = vpop.permute.xlu0 %848
        %850 = vrot.lane.b32.xlu0 %v735, 125
        %v851 = vpop.permute.xlu0 %850
        %852 = vrot.lane.b32.xlu0 %v736, 125
        %v853 = vpop.permute.xlu0 %852
        %854 = vrot.lane.b32.xlu0 %v737, 125
        %v855 = vpop.permute.xlu0 %854
        %856 = vrot.lane.b32.xlu0 %v738, 125
        %v857 = vpop.permute.xlu0 %856
        %858 = vrot.lane.b32.xlu0 %v739, 125
        %v859 = vpop.permute.xlu0 %858
        %v860 = vsel %vm284, %v849, %v851
        %v861 = vsel %vm284, %v853, %v855
        %v862 = vsel %vm284, %v857, %v859
        %v866 = vmax.f32 %v824, %v860
        %v867 = vmax.f32 %v825, %v861
        %v868 = vmax.f32 %v826, %v862
        %869 = vrot.lane.b32.xlu0 %v746, 125
        %v870 = vpop.permute.xlu0 %869
        %871 = vrot.lane.b32.xlu0 %v747, 125
        %v872 = vpop.permute.xlu0 %871
        %873 = vrot.lane.b32.xlu0 %v748, 125
        %v874 = vpop.permute.xlu0 %873
        %875 = vrot.lane.b32.xlu0 %v749, 125
        %v876 = vpop.permute.xlu0 %875
        %877 = vrot.lane.b32.xlu0 %v750, 125
        %v878 = vpop.permute.xlu0 %877
        %879 = vrot.lane.b32.xlu0 %v751, 125
        %v880 = vpop.permute.xlu0 %879
        %v881 = vsel %vm284, %v870, %v872
        %v882 = vsel %vm284, %v874, %v876
        %v883 = vsel %vm284, %v878, %v880
        %v887 = vmin.f32 %v845, %v881
        %v888 = vmin.f32 %v846, %v882
        %v889 = vmin.f32 %v847, %v883
        %890 = vrot.lane.b32.xlu0 %v734, 124
        %v891 = vpop.permute.xlu0 %890
        %892 = vrot.lane.b32.xlu0 %v735, 124
        %v893 = vpop.permute.xlu0 %892
        %894 = vrot.lane.b32.xlu0 %v736, 124
        %v895 = vpop.permute.xlu0 %894
        %896 = vrot.lane.b32.xlu0 %v737, 124
        %v897 = vpop.permute.xlu0 %896
        %898 = vrot.lane.b32.xlu0 %v738, 124
        %v899 = vpop.permute.xlu0 %898
        %900 = vrot.lane.b32.xlu0 %v739, 124
        %v901 = vpop.permute.xlu0 %900
        %v902 = vsel %vm327, %v891, %v893
        %v903 = vsel %vm327, %v895, %v897
        %v904 = vsel %vm327, %v899, %v901
        %v908 = vmax.f32 %v866, %v902
        %v909 = vmax.f32 %v867, %v903
        %v910 = vmax.f32 %v868, %v904
        %911 = vrot.lane.b32.xlu0 %v746, 124
        %v912 = vpop.permute.xlu0 %911
        %913 = vrot.lane.b32.xlu0 %v747, 124
        %v914 = vpop.permute.xlu0 %913
        %915 = vrot.lane.b32.xlu0 %v748, 124
        %v916 = vpop.permute.xlu0 %915
        %917 = vrot.lane.b32.xlu0 %v749, 124
        %v918 = vpop.permute.xlu0 %917
        %919 = vrot.lane.b32.xlu0 %v750, 124
        %v920 = vpop.permute.xlu0 %919
        %921 = vrot.lane.b32.xlu0 %v751, 124
        %v922 = vpop.permute.xlu0 %921
        %v923 = vsel %vm327, %v912, %v914
        %v924 = vsel %vm327, %v916, %v918
        %v925 = vsel %vm327, %v920, %v922
        %v929 = vmin.f32 %v887, %v923
        %v930 = vmin.f32 %v888, %v924
        %v931 = vmin.f32 %v889, %v925
        %v935 = vrot.slane %v908, 1
        %v936 = vrot.slane %v909, 1
        %v937 = vsel %vm361, %v935, %v936
        %v938 = vrot.slane %v910, 1
        %v939 = vsel %vm361, %v936, %v938
        %v942 = vmax.f32 %v908, %v937
        %v943 = vmax.f32 %v909, %v939
        %v947 = vrot.slane %v929, 1
        %v948 = vrot.slane %v930, 1
        %v949 = vsel %vm361, %v947, %v948
        %v950 = vrot.slane %v931, 1
        %v951 = vsel %vm361, %v948, %v950
        %v954 = vmin.f32 %v929, %v949
        %v955 = vmin.f32 %v930, %v951
        %v956 = vrot.slane %v908, 2
        %v957 = vrot.slane %v909, 2
        %v958 = vsel %vm383, %v956, %v957
        %v959 = vrot.slane %v910, 2
        %v960 = vsel %vm383, %v957, %v959
        %v963 = vmax.f32 %v942, %v958
        %v964 = vmax.f32 %v943, %v960
        %v965 = vrot.slane %v929, 2
        %v966 = vrot.slane %v930, 2
        %v967 = vsel %vm383, %v965, %v966
        %v968 = vrot.slane %v931, 2
        %v969 = vsel %vm383, %v966, %v968
        %v972 = vmin.f32 %v954, %v967
        %v973 = vmin.f32 %v955, %v969
        %v974 = vrot.slane %v908, 3
        %v975 = vrot.slane %v909, 3
        %v976 = vsel %vm402, %v974, %v975
        %v977 = vrot.slane %v910, 3
        %v978 = vsel %vm402, %v975, %v977
        %v981 = vmax.f32 %v963, %v976
        %v982 = vmax.f32 %v964, %v978
        %v983 = vrot.slane %v929, 3
        %v984 = vrot.slane %v930, 3
        %v985 = vsel %vm402, %v983, %v984
        %v986 = vrot.slane %v931, 3
        %v987 = vsel %vm402, %v984, %v986
        %v990 = vmin.f32 %v972, %v985
        %v991 = vmin.f32 %v973, %v987
        %v992 = vrot.slane %v908, 4
        %v993 = vrot.slane %v909, 4
        %v994 = vsel %vm421, %v992, %v993
        %v995 = vrot.slane %v910, 4
        %v996 = vsel %vm421, %v993, %v995
        %v999 = vmax.f32 %v981, %v994
        %v1000 = vmax.f32 %v982, %v996
        %v1001 = vrot.slane %v929, 4
        %v1002 = vrot.slane %v930, 4
        %v1003 = vsel %vm421, %v1001, %v1002
        %v1004 = vrot.slane %v931, 4
        %v1005 = vsel %vm421, %v1002, %v1004
        %v1008 = vmin.f32 %v990, %v1003
        %v1009 = vmin.f32 %v991, %v1005
        %v1010 = vsub.f32 %v999, %v1008
        %v1011 = vsub.f32 %v1000, %v1009
        %s1012 = sld [smem:[#allocation2 + $0x2]]
        %v1013 = vstv %s1012
        %v1014 = vmul.f32 %v1010, %v1013
        %v1015 = vmul.f32 %v1011, %v1013
        %v1016 = vadd.f32 %v731, %v1014
        %v1017 = vadd.f32 %v732, %v1015
        %s1018 = scalar_lea.vmem %s155, 144
        %v1019 = vld [vmem:[%s1018] sm:$0xff]
        %v1020 = vld [vmem:[%s1018 + $0x8] sm:$0xff]
        %v1021 = vld [vmem:[%s1018 + $0x10] sm:$0xff]
        %v1022 = vld [vmem:[%s1018 + $0x18] sm:$0xff]
        %v1023 = vld [vmem:[%s1018 + $0x20] sm:$0xf]
        %v1024 = vld [vmem:[%s1018 + $0x28] sm:$0xf]
        %vm1025 = vcmp.eq.f32.partialorder %v1019, -inf
        %vm1026 = vcmp.eq.f32.partialorder %v1020, -inf
        %vm1027 = vcmp.eq.f32.partialorder %v1021, -inf
        %vm1028 = vcmp.eq.f32.partialorder %v1022, -inf
        %vm1029 = vcmp.eq.f32.partialorder %v1023, -inf
        %vm1030 = vcmp.eq.f32.partialorder %v1024, -inf
        %v1031 = vsel %vm1025, inf, %v1019
        %v1032 = vsel %vm1026, inf, %v1020
        %v1033 = vsel %vm1027, inf, %v1021
        %v1034 = vsel %vm1028, inf, %v1022
        %v1035 = vsel %vm1029, inf, %v1023
        %v1036 = vsel %vm1030, inf, %v1024
        %1043 = vrot.lane.b32.xlu0 %v1019, 127
        %v1044 = vpop.permute.xlu0 %1043
        %1045 = vrot.lane.b32.xlu0 %v1020, 127
        %v1046 = vpop.permute.xlu0 %1045
        %1047 = vrot.lane.b32.xlu0 %v1021, 127
        %v1048 = vpop.permute.xlu0 %1047
        %1049 = vrot.lane.b32.xlu0 %v1022, 127
        %v1050 = vpop.permute.xlu0 %1049
        %1051 = vrot.lane.b32.xlu0 %v1023, 127
        %v1052 = vpop.permute.xlu0 %1051
        %1053 = vrot.lane.b32.xlu0 %v1024, 127
        %v1054 = vpop.permute.xlu0 %1053
        %v1055 = vsel %vm192, %v1044, %v1046
        %v1056 = vsel %vm192, %v1048, %v1050
        %v1057 = vsel %vm192, %v1052, %v1054
        %v1061 = vmax.f32 %v1019, %v1055
        %v1062 = vmax.f32 %v1021, %v1056
        %v1063 = vmax.f32 %v1023, %v1057
        %1070 = vrot.lane.b32.xlu0 %v1031, 127
        %v1071 = vpop.permute.xlu0 %1070
        %1072 = vrot.lane.b32.xlu0 %v1032, 127
        %v1073 = vpop.permute.xlu0 %1072
        %1074 = vrot.lane.b32.xlu0 %v1033, 127
        %v1075 = vpop.permute.xlu0 %1074
        %1076 = vrot.lane.b32.xlu0 %v1034, 127
        %v1077 = vpop.permute.xlu0 %1076
        %1078 = vrot.lane.b32.xlu0 %v1035, 127
        %v1079 = vpop.permute.xlu0 %1078
        %1080 = vrot.lane.b32.xlu0 %v1036, 127
        %v1081 = vpop.permute.xlu0 %1080
        %v1082 = vsel %vm192, %v1071, %v1073
        %v1083 = vsel %vm192, %v1075, %v1077
        %v1084 = vsel %vm192, %v1079, %v1081
        %v1088 = vmin.f32 %v1031, %v1082
        %v1089 = vmin.f32 %v1033, %v1083
        %v1090 = vmin.f32 %v1035, %v1084
        %1091 = vrot.lane.b32.xlu0 %v1019, 126
        %v1092 = vpop.permute.xlu0 %1091
        %1093 = vrot.lane.b32.xlu0 %v1020, 126
        %v1094 = vpop.permute.xlu0 %1093
        %1095 = vrot.lane.b32.xlu0 %v1021, 126
        %v1096 = vpop.permute.xlu0 %1095
        %1097 = vrot.lane.b32.xlu0 %v1022, 126
        %v1098 = vpop.permute.xlu0 %1097
        %1099 = vrot.lane.b32.xlu0 %v1023, 126
        %v1100 = vpop.permute.xlu0 %1099
        %1101 = vrot.lane.b32.xlu0 %v1024, 126
        %v1102 = vpop.permute.xlu0 %1101
        %v1103 = vsel %vm241, %v1092, %v1094
        %v1104 = vsel %vm241, %v1096, %v1098
        %v1105 = vsel %vm241, %v1100, %v1102
        %v1109 = vmax.f32 %v1061, %v1103
        %v1110 = vmax.f32 %v1062, %v1104
        %v1111 = vmax.f32 %v1063, %v1105
        %1112 = vrot.lane.b32.xlu0 %v1031, 126
        %v1113 = vpop.permute.xlu0 %1112
        %1114 = vrot.lane.b32.xlu0 %v1032, 126
        %v1115 = vpop.permute.xlu0 %1114
        %1116 = vrot.lane.b32.xlu0 %v1033, 126
        %v1117 = vpop.permute.xlu0 %1116
        %1118 = vrot.lane.b32.xlu0 %v1034, 126
        %v1119 = vpop.permute.xlu0 %1118
        %1120 = vrot.lane.b32.xlu0 %v1035, 126
        %v1121 = vpop.permute.xlu0 %1120
        %1122 = vrot.lane.b32.xlu0 %v1036, 126
        %v1123 = vpop.permute.xlu0 %1122
        %v1124 = vsel %vm241, %v1113, %v1115
        %v1125 = vsel %vm241, %v1117, %v1119
        %v1126 = vsel %vm241, %v1121, %v1123
        %v1130 = vmin.f32 %v1088, %v1124
        %v1131 = vmin.f32 %v1089, %v1125
        %v1132 = vmin.f32 %v1090, %v1126
        %1133 = vrot.lane.b32.xlu0 %v1019, 125
        %v1134 = vpop.permute.xlu0 %1133
        %1135 = vrot.lane.b32.xlu0 %v1020, 125
        %v1136 = vpop.permute.xlu0 %1135
        %1137 = vrot.lane.b32.xlu0 %v1021, 125
        %v1138 = vpop.permute.xlu0 %1137
        %1139 = vrot.lane.b32.xlu0 %v1022, 125
        %v1140 = vpop.permute.xlu0 %1139
        %1141 = vrot.lane.b32.xlu0 %v1023, 125
        %v1142 = vpop.permute.xlu0 %1141
        %1143 = vrot.lane.b32.xlu0 %v1024, 125
        %v1144 = vpop.permute.xlu0 %1143
        %v1145 = vsel %vm284, %v1134, %v1136
        %v1146 = vsel %vm284, %v1138, %v1140
        %v1147 = vsel %vm284, %v1142, %v1144
        %v1151 = vmax.f32 %v1109, %v1145
        %v1152 = vmax.f32 %v1110, %v1146
        %v1153 = vmax.f32 %v1111, %v1147
        %1154 = vrot.lane.b32.xlu0 %v1031, 125
        %v1155 = vpop.permute.xlu0 %1154
        %1156 = vrot.lane.b32.xlu0 %v1032, 125
        %v1157 = vpop.permute.xlu0 %1156
        %1158 = vrot.lane.b32.xlu0 %v1033, 125
        %v1159 = vpop.permute.xlu0 %1158
        %1160 = vrot.lane.b32.xlu0 %v1034, 125
        %v1161 = vpop.permute.xlu0 %1160
        %1162 = vrot.lane.b32.xlu0 %v1035, 125
        %v1163 = vpop.permute.xlu0 %1162
        %1164 = vrot.lane.b32.xlu0 %v1036, 125
        %v1165 = vpop.permute.xlu0 %1164
        %v1166 = vsel %vm284, %v1155, %v1157
        %v1167 = vsel %vm284, %v1159, %v1161
        %v1168 = vsel %vm284, %v1163, %v1165
        %v1172 = vmin.f32 %v1130, %v1166
        %v1173 = vmin.f32 %v1131, %v1167
        %v1174 = vmin.f32 %v1132, %v1168
        %1175 = vrot.lane.b32.xlu0 %v1019, 124
        %v1176 = vpop.permute.xlu0 %1175
        %1177 = vrot.lane.b32.xlu0 %v1020, 124
        %v1178 = vpop.permute.xlu0 %1177
        %1179 = vrot.lane.b32.xlu0 %v1021, 124
        %v1180 = vpop.permute.xlu0 %1179
        %1181 = vrot.lane.b32.xlu0 %v1022, 124
        %v1182 = vpop.permute.xlu0 %1181
        %1183 = vrot.lane.b32.xlu0 %v1023, 124
        %v1184 = vpop.permute.xlu0 %1183
        %1185 = vrot.lane.b32.xlu0 %v1024, 124
        %v1186 = vpop.permute.xlu0 %1185
        %v1187 = vsel %vm327, %v1176, %v1178
        %v1188 = vsel %vm327, %v1180, %v1182
        %v1189 = vsel %vm327, %v1184, %v1186
        %v1193 = vmax.f32 %v1151, %v1187
        %v1194 = vmax.f32 %v1152, %v1188
        %v1195 = vmax.f32 %v1153, %v1189
        %1196 = vrot.lane.b32.xlu0 %v1031, 124
        %v1197 = vpop.permute.xlu0 %1196
        %1198 = vrot.lane.b32.xlu0 %v1032, 124
        %v1199 = vpop.permute.xlu0 %1198
        %1200 = vrot.lane.b32.xlu0 %v1033, 124
        %v1201 = vpop.permute.xlu0 %1200
        %1202 = vrot.lane.b32.xlu0 %v1034, 124
        %v1203 = vpop.permute.xlu0 %1202
        %1204 = vrot.lane.b32.xlu0 %v1035, 124
        %v1205 = vpop.permute.xlu0 %1204
        %1206 = vrot.lane.b32.xlu0 %v1036, 124
        %v1207 = vpop.permute.xlu0 %1206
        %v1208 = vsel %vm327, %v1197, %v1199
        %v1209 = vsel %vm327, %v1201, %v1203
        %v1210 = vsel %vm327, %v1205, %v1207
        %v1214 = vmin.f32 %v1172, %v1208
        %v1215 = vmin.f32 %v1173, %v1209
        %v1216 = vmin.f32 %v1174, %v1210
        %v1220 = vrot.slane %v1193, 1
        %v1221 = vrot.slane %v1194, 1
        %v1222 = vsel %vm361, %v1220, %v1221
        %v1223 = vrot.slane %v1195, 1
        %v1224 = vsel %vm361, %v1221, %v1223
        %v1227 = vmax.f32 %v1193, %v1222
        %v1228 = vmax.f32 %v1194, %v1224
        %v1232 = vrot.slane %v1214, 1
        %v1233 = vrot.slane %v1215, 1
        %v1234 = vsel %vm361, %v1232, %v1233
        %v1235 = vrot.slane %v1216, 1
        %v1236 = vsel %vm361, %v1233, %v1235
        %v1239 = vmin.f32 %v1214, %v1234
        %v1240 = vmin.f32 %v1215, %v1236
        %v1241 = vrot.slane %v1193, 2
        %v1242 = vrot.slane %v1194, 2
        %v1243 = vsel %vm383, %v1241, %v1242
        %v1244 = vrot.slane %v1195, 2
        %v1245 = vsel %vm383, %v1242, %v1244
        %v1248 = vmax.f32 %v1227, %v1243
        %v1249 = vmax.f32 %v1228, %v1245
        %v1250 = vrot.slane %v1214, 2
        %v1251 = vrot.slane %v1215, 2
        %v1252 = vsel %vm383, %v1250, %v1251
        %v1253 = vrot.slane %v1216, 2
        %v1254 = vsel %vm383, %v1251, %v1253
        %v1257 = vmin.f32 %v1239, %v1252
        %v1258 = vmin.f32 %v1240, %v1254
        %v1259 = vrot.slane %v1193, 3
        %v1260 = vrot.slane %v1194, 3
        %v1261 = vsel %vm402, %v1259, %v1260
        %v1262 = vrot.slane %v1195, 3
        %v1263 = vsel %vm402, %v1260, %v1262
        %v1266 = vmax.f32 %v1248, %v1261
        %v1267 = vmax.f32 %v1249, %v1263
        %v1268 = vrot.slane %v1214, 3
        %v1269 = vrot.slane %v1215, 3
        %v1270 = vsel %vm402, %v1268, %v1269
        %v1271 = vrot.slane %v1216, 3
        %v1272 = vsel %vm402, %v1269, %v1271
        %v1275 = vmin.f32 %v1257, %v1270
        %v1276 = vmin.f32 %v1258, %v1272
        %v1277 = vrot.slane %v1193, 4
        %v1278 = vrot.slane %v1194, 4
        %v1279 = vsel %vm421, %v1277, %v1278
        %v1280 = vrot.slane %v1195, 4
        %v1281 = vsel %vm421, %v1278, %v1280
        %v1284 = vmax.f32 %v1266, %v1279
        %v1285 = vmax.f32 %v1267, %v1281
        %v1286 = vrot.slane %v1214, 4
        %v1287 = vrot.slane %v1215, 4
        %v1288 = vsel %vm421, %v1286, %v1287
        %v1289 = vrot.slane %v1216, 4
        %v1290 = vsel %vm421, %v1287, %v1289
        %v1293 = vmin.f32 %v1275, %v1288
        %v1294 = vmin.f32 %v1276, %v1290
        %v1295 = vsub.f32 %v1284, %v1293
        %v1296 = vsub.f32 %v1285, %v1294
        %s1297 = sld [smem:[#allocation2 + $0x3]]
        %v1298 = vstv %s1297
        %v1299 = vmul.f32 %v1295, %v1298
        %v1300 = vmul.f32 %v1296, %v1298
        %v1301 = vadd.f32 %v1016, %v1299
        %v1302 = vadd.f32 %v1017, %v1300
        %v1303 = vmul.f32 %v1301, 1.442695
        %v1304 = vpow.pop %v1303
        %v1305 = vmul.f32 %v1302, 1.442695
        %v1306 = vpow.pop %v1305
        %1307 = vst [vmem:[%s150] sm:$0xff] %v1304
        %1308 = vst [vmem:[%s150 + $0x8] sm:$0xff] %v1306
        %s1309 = sand.u32 %s72, 1
        %s1310 = scalar_lea.sflag [#allocation3], %s1309
        %s1311 = sand.u32 %s72, 1
        %s1312 = smul.addr %s1311, 16
        %s1313 = scalar_lea.vmem [#allocation5], %s1312
        // Predicated region
        $region33: #{tpu_custom_call.1} parent=27 // pred_check
          %p1314 = pneg %p82
        $region34: #{tpu_custom_call.1} parent=27 // pred_check_branch
          %1316 = sbr.rel (%p1314) target = $region36
        $region35: #{tpu_custom_call.1} parent=27 // pred_region
          %1318 = vsyncadd %s1310, 0
          %s1319 = smul.addr %s17, 2
          %s1320 = smul.addr %s1319, 8
          %s1321 = scalar_lea.hbm %s2, %s1320
          %s1322 = sshll.u32 %s1313, 4
          %s1323 = int_to_ptr.vmem [resolvable:$true] %s1322
          %s1324 = sshll.u32 %s1321, 4
          %s1325 = int_to_ptr.hbm [resolvable:$true] %s1324
          %1330 = dma.vmem_to_hbm [thread:$0]  %s1323, 256, %s1325, %s1310, 128, 128, 8
        $region36: #{tpu_custom_call.1} parent=27 // pred_fallthru
          _
      $region28: #{tpu_custom_call.1} parent=5 // pred_fallthru
        _
      %p1331 = scmp.le.s32.totalorder 2, %s12
      // Predicated region
      $region37: #{tpu_custom_call.1} parent=5 // pred_check
        %p1332 = pneg %p1331
      $region38: #{tpu_custom_call.1} parent=5 // pred_check_branch
        %1334 = sbr.rel (%p1332) target = $region40
      $region39: #{tpu_custom_call.1} parent=5 // pred_region
        %s1335 = ssub.s32 %s12, 2
        // Predicated region
        $region41: #{tpu_custom_call.1} parent=39 // pred_check
          %p1336 = pneg %p88
        $region42: #{tpu_custom_call.1} parent=39 // pred_check_branch
          %1338 = sbr.rel (%p1336) target = $region44
        $region43: #{tpu_custom_call.1} parent=39 // pred_region
          %s1339 = sand.u32 %s73, 1
          %s1340 = scalar_lea.sflag [#allocation3], %s1339
          %s1341 = sand.u32 %s73, 1
          %s1342 = smul.addr %s1341, 16
          %s1343 = scalar_lea.vmem [#allocation5], %s1342
          %1345 = dma.done %s1340, 256
        $region44: #{tpu_custom_call.1} parent=39 // pred_fallthru
          _
      $region40: #{tpu_custom_call.1} parent=5 // pred_fallthru
        _
    $region6: #{tpu_custom_call.1} parent=1 // loop_footer
      %s16 = sadd.s32 1, %s12
    $region7: #{tpu_custom_call.1} parent=1 // loop_footer_branch
      %11 = sbr.rel target = $region3
    $region8: #{tpu_custom_call.1} parent=1 // loop_exit
      _
    %1346 = vsyncpa [#allocation3], 1
    %s1347 = scalar_lea.sflag [#allocation3], 1
    %1348 = vsyncpa %s1347, 1
    %1349 = vsyncpa [#allocation4], 1
    %s1350 = scalar_lea.sflag [#allocation4], 1
    %1351 = vsyncpa %s1350, 1

</llo_original>
